<compile_context>
chip_gen: v7x
topology: tpu7x:2x2x1
jax: 0.10.0
libtpu: 0.0.40
codegen_flags: <defaults>
</compile_context>

<pallas_src>
import jax
import jax.numpy as jnp
from jax import lax
from jax.experimental import pallas as pl
from jax.experimental.pallas import tpu as pltpu


# ------------------------------ Pallas kernel --------------------------------

def _basic_block_kernel(x_ref, m1_ref, b1_ref, m2_ref, b2_ref,
                        out_ref, relu_ref, xp_ref, hp_ref):
    """Fused conv3x3+BN+ReLU -> conv3x3+BN -> +residual -> (out, relu(out)).

    Shapes (one grid step == one batch element):
      x_ref    : (1, H, W*C)     input rows, channels-minor (lane-dense)
      m1_ref   : (3, W*C, W*C)   banded conv1 weights, BN1 scale folded in
      b1_ref   : (1, W*C)        BN1 bias tiled over W
      m2_ref   : (3, W*C, W*C)   banded conv2 weights, BN2 scale folded in
      b2_ref   : (1, W*C)        BN2 bias tiled over W
      out_ref  : (1, H, W*C)     out  (post-residual, pre-ReLU)
      relu_ref : (1, H, W*C)     relu(out)
      xp_ref   : (H+2, W*C) VMEM row-padded input (rows 0 and H+1 = zero halo)
      hp_ref   : (H+2, W*C) VMEM row-padded conv1 activation
    """
    H = out_ref.shape[1]
    WC = out_ref.shape[2]
    zero_row = jnp.zeros((1, WC), jnp.float32)

    # ---- conv1 + folded BN1 + ReLU (halo built in VMEM, no host pad) -------
    xp_ref[0:1, :] = zero_row
    xp_ref[H + 1:H + 2, :] = zero_row
    xp_ref[1:H + 1, :] = x_ref[0]

    acc = jnp.zeros((H, WC), jnp.float32)
    for kh in range(3):                       # 3 MXU calls, K = W*C (=128)
        acc = acc + jnp.dot(xp_ref[kh:kh + H, :], m1_ref[kh],
                            preferred_element_type=jnp.float32)
    h = jnp.maximum(acc + b1_ref[...], 0.0)

    # ---- conv2 + folded BN2 + residual; `h` never leaves VMEM --------------
    hp_ref[0:1, :] = zero_row
    hp_ref[H + 1:H + 2, :] = zero_row
    hp_ref[1:H + 1, :] = h

    acc = jnp.zeros((H, WC), jnp.float32)
    for kh in range(3):
        acc = acc + jnp.dot(hp_ref[kh:kh + H, :], m2_ref[kh],
                            preferred_element_type=jnp.float32)
    y = acc + b2_ref[...] + x_ref[0]          # identity residual (stride=1)
    out_ref[0] = y
    relu_ref[0] = jnp.maximum(y, 0.0)


# ------------------------------ JAX wrappers ---------------------------------

def _fold_bn(w_hwio, gamma, beta, mean, var, eps=1e-5):
    """Fold eval-mode BatchNorm into the conv: returns (w * scale, bias)."""
    scale = gamma * lax.rsqrt(var + eps)
    return w_hwio * scale[None, None, None, :], beta - mean * scale


def _banded_weights(w_hwio, W):
    """HWIO (3,3,Cin,Cout) -> (3, W*Cin, W*Cout) banded matrices.

    M[kh, win*Cin+ci, w*Cout+co] = w[kh, win-w+1, ci, co] when 0 <= win-w+1 < 3
    else 0, i.e. a 'SAME'-padded 3-tap conv along W expressed as one matmul per
    kh row offset (column borders are handled by the zero bands).
    """
    KH, KW, Cin, Cout = w_hwio.shape
    win = jnp.arange(W)[:, None]                            # input column
    wout = jnp.arange(W)[None, :]                           # output column
    kw = win - wout + 1                                     # (W, W)
    valid = (kw >= 0) & (kw < KW)
    taps = w_hwio[:, jnp.clip(kw, 0, KW - 1)]               # (KH, W, W, Cin, Cout)
    taps = jnp.where(valid[None, :, :, None, None], taps, 0.0)
    return taps.transpose(0, 1, 3, 2, 4).reshape(KH, W * Cin, W * Cout)


def basic_block_forward_nhwc(x_nhwc, params):
    """BasicBlock forward in NHWC (stride=1, no downsample). Returns (relu, out)."""
    N, H, W, C = x_nhwc.shape
    assert params["w1"].shape == (3, 3, C, C) and params["w2"].shape == (3, 3, C, C), \
        "identity-residual BasicBlock requires inplanes == planes, stride == 1"

    w1, b1 = _fold_bn(params["w1"], params["bn1_gamma"], params["bn1_beta"],
                      params["bn1_mean"], params["bn1_var"])
    w2, b2 = _fold_bn(params["w2"], params["bn2_gamma"], params["bn2_beta"],
                      params["bn2_mean"], params["bn2_var"])

    m1 = _banded_weights(w1, W)                  # (3, W*C, W*C)
    m2 = _banded_weights(w2, W)
    b1t = jnp.tile(b1, W).reshape(1, W * C)      # bias in (w*C + c) lane layout
    b2t = jnp.tile(b2, W).reshape(1, W * C)
    x_flat = x_nhwc.reshape(N, H, W * C)         # lane-dense rows (W*C = 128 here)

    # TODO(synk): cast x/m1/m2 to bf16 (keeping f32 accumulation) for ~2x HBM
    #             bandwidth / MXU rate once the model tolerates it.
    # TODO(synk): for real SwiftNet resolutions add spatial H-tiling with a
    #             2-row halo so double-buffered tiles fit v7x's 64 MiB VMEM and
    #             the parallel grid exceeds 2 TensorCores; whole-image blocks
    #             are appropriate at this toy size.
    out_flat, relu_flat = pl.pallas_call(
        _basic_block_kernel,
        out_shape=(jax.ShapeDtypeStruct((N, H, W * C), jnp.float32),
                   jax.ShapeDtypeStruct((N, H, W * C), jnp.float32)),
        grid_spec=pltpu.PrefetchScalarGridSpec(
            num_scalar_prefetch=0,
            grid=(N,),
            in_specs=[
                pl.BlockSpec((1, H, W * C), lambda n: (n, 0, 0)),
                pl.BlockSpec((3, W * C, W * C), lambda n: (0, 0, 0)),
                pl.BlockSpec((1, W * C), lambda n: (0, 0)),
                pl.BlockSpec((3, W * C, W * C), lambda n: (0, 0, 0)),
                pl.BlockSpec((1, W * C), lambda n: (0, 0)),
            ],
            out_specs=[
                pl.BlockSpec((1, H, W * C), lambda n: (n, 0, 0)),
                pl.BlockSpec((1, H, W * C), lambda n: (n, 0, 0)),
            ],
            scratch_shapes=[
                pltpu.VMEM((H + 2, W * C), jnp.float32),
                pltpu.VMEM((H + 2, W * C), jnp.float32),
            ],
        ),
        compiler_params=pltpu.CompilerParams(
            dimension_semantics=("parallel",)),
    )(x_flat, m1, b1t, m2, b2t)

    return (relu_flat.reshape(N, H, W, C), out_flat.reshape(N, H, W, C))


def basic_block_forward(x_nchw, params):
    """NCHW adapter for parity with the PyTorch module (returns (relu, out)).
    At the model level you would stay in NHWC and call basic_block_forward_nhwc
    directly, avoiding these boundary transposes."""
    x = jnp.transpose(x_nchw, (0, 2, 3, 1))
    relu, out = basic_block_forward_nhwc(x, params)
    return (jnp.transpose(relu, (0, 3, 1, 2)), jnp.transpose(out, (0, 3, 1, 2)))


# -------------------------------- reference ----------------------------------

def _reference_forward(x_nchw, params):
    x = jnp.transpose(x_nchw, (0, 2, 3, 1))
    dn = ("NHWC", "HWIO", "NHWC")

    def conv(inp, w):
        return lax.conv_general_dilated(inp, w, (1, 1), "SAME",
                                        dimension_numbers=dn)

    def bn(y, g, b, m, v, eps=1e-5):
        s = g * lax.rsqrt(v + eps)
        return y * s + (b - m * s)

    h = jnp.maximum(bn(conv(x, params["w1"]), params["bn1_gamma"],
                       params["bn1_beta"], params["bn1_mean"],
                       params["bn1_var"]), 0.0)
    out = bn(conv(h, params["w2"]), params["bn2_gamma"], params["bn2_beta"],
             params["bn2_mean"], params["bn2_var"]) + x
    relu = jnp.maximum(out, 0.0)
    return (jnp.transpose(relu, (0, 3, 1, 2)),
            jnp.transpose(out, (0, 3, 1, 2)))


# ----------------------------------- main -------------------------------------

if __name__ == "__main__":
    key = jax.random.PRNGKey(0)
    N, C, H, W = 2, 8, 16, 16          # inplanes == planes, stride=1, no downsample

    ks = jax.random.split(key, 8)
    x = jax.random.normal(ks[0], (N, C, H, W), jnp.float32)

    params = {
        # conv weights in HWIO (3, 3, Cin, Cout), bias=False as in conv3x3
        "w1": jax.random.normal(ks[1], (3, 3, C, C), jnp.float32) * 0.1,
        "w2": jax.random.normal(ks[2], (3, 3, C, C), jnp.float32) * 0.1,
        # BatchNorm2d parameters (eval-mode running stats)
        "bn1_gamma": 1.0 + 0.1 * jax.random.normal(ks[3], (C,), jnp.float32),
        "bn1_beta": 0.1 * jax.random.normal(ks[4], (C,), jnp.float32),
        "bn1_mean": 0.05 * jax.random.normal(ks[5], (C,), jnp.float32),
        "bn1_var": jnp.abs(1.0 + 0.1 * jax.random.normal(ks[6], (C,), jnp.float32)),
        "bn2_gamma": 1.0 + 0.1 * jax.random.normal(ks[7], (C,), jnp.float32),
        "bn2_beta": jnp.linspace(-0.1, 0.1, C, dtype=jnp.float32),
        "bn2_mean": jnp.linspace(-0.05, 0.05, C, dtype=jnp.float32),
        "bn2_var": jnp.linspace(0.9, 1.1, C, dtype=jnp.float32),
    }

    fwd = jax.jit(basic_block_forward)
    relu_out, out = jax.block_until_ready(fwd(x, params))
    relu_ref, out_ref = _reference_forward(x, params)

    # Only difference vs. the reference is fp32 summation order (BN folded into
    # the weights, banded matmul), so a 1e-3 tolerance is comfortably tight.
    assert jnp.allclose(relu_out, relu_ref, atol=1e-3, rtol=1e-3)
    assert jnp.allclose(out, out_ref, atol=1e-3, rtol=1e-3)
    print("KERNEL_OK")
</pallas_src>

<mosaic_0001>
module attributes {stable_mosaic.version = 11 : i64} {
  func.func @_basic_block_kernel(%arg0: i32, %arg1: memref<1x16x128xf32, #tpu.memory_space<vmem>>, %arg2: memref<3x128x128xf32, #tpu.memory_space<vmem>>, %arg3: memref<1x128xf32, #tpu.memory_space<vmem>>, %arg4: memref<3x128x128xf32, #tpu.memory_space<vmem>>, %arg5: memref<1x128xf32, #tpu.memory_space<vmem>>, %arg6: memref<1x16x128xf32, #tpu.memory_space<vmem>>, %arg7: memref<1x16x128xf32, #tpu.memory_space<vmem>>, %arg8: memref<18x128xf32, #tpu.memory_space<vmem>>, %arg9: memref<18x128xf32, #tpu.memory_space<vmem>>) attributes {dimension_semantics = [#tpu.dimension_semantics<parallel>], iteration_bounds = array<i64: 2>, scalar_prefetch = 0 : i64, scratch_operands = 2 : i64, tpu.core_type = #tpu.core_type<tc>, window_params = [{transform_indices = @transform_0, window_bounds = array<i64: 1, 16, 128>}, {pipeline_mode = #tpu.pipeline_mode<synchronous>, transform_indices = @transform_1, window_bounds = array<i64: 3, 128, 128>}, {pipeline_mode = #tpu.pipeline_mode<synchronous>, transform_indices = @transform_2, window_bounds = array<i64: 1, 128>}, {pipeline_mode = #tpu.pipeline_mode<synchronous>, transform_indices = @transform_3, window_bounds = array<i64: 3, 128, 128>}, {pipeline_mode = #tpu.pipeline_mode<synchronous>, transform_indices = @transform_4, window_bounds = array<i64: 1, 128>}, {transform_indices = @transform_5, window_bounds = array<i64: 1, 16, 128>}, {transform_indices = @transform_6, window_bounds = array<i64: 1, 16, 128>}]} {
    %cst = arith.constant 0.000000e+00 : f32
    %0 = vector.broadcast %cst : f32 to vector<1x128xf32>
    %c0 = arith.constant 0 : index
    %c0_0 = arith.constant 0 : index
    %1 = vector.load %arg8[%c0, %c0_0] : memref<18x128xf32, #tpu.memory_space<vmem>>, vector<1x128xf32>
    tpu.vector_store %arg8[%c0, %c0_0], %0 {strides = array<i32>} : memref<18x128xf32, #tpu.memory_space<vmem>>, vector<1x128xf32>,
    %c17 = arith.constant 17 : index
    %c0_1 = arith.constant 0 : index
    %2 = vector.load %arg8[%c17, %c0_1] : memref<18x128xf32, #tpu.memory_space<vmem>>, vector<1x128xf32>
    tpu.vector_store %arg8[%c17, %c0_1], %0 {strides = array<i32>} : memref<18x128xf32, #tpu.memory_space<vmem>>, vector<1x128xf32>,
    %c0_2 = arith.constant 0 : index
    %c0_3 = arith.constant 0 : index
    %c0_4 = arith.constant 0 : index
    %3 = vector.load %arg1[%c0_2, %c0_3, %c0_4] : memref<1x16x128xf32, #tpu.memory_space<vmem>>, vector<1x16x128xf32>
    %4 = vector.shape_cast %3 : vector<1x16x128xf32> to vector<16x128xf32>
    %c1 = arith.constant 1 : index
    %c0_5 = arith.constant 0 : index
    %5 = vector.load %arg8[%c1, %c0_5] : memref<18x128xf32, #tpu.memory_space<vmem>>, vector<16x128xf32>
    tpu.vector_store %arg8[%c1, %c0_5], %4 {strides = array<i32>} : memref<18x128xf32, #tpu.memory_space<vmem>>, vector<16x128xf32>,
    %cst_6 = arith.constant 0.000000e+00 : f32
    %6 = vector.broadcast %cst_6 : f32 to vector<16x128xf32>
    %c0_7 = arith.constant 0 : index
    %c0_8 = arith.constant 0 : index
    %7 = vector.load %arg8[%c0_7, %c0_8] : memref<18x128xf32, #tpu.memory_space<vmem>>, vector<16x128xf32>
    %c0_9 = arith.constant 0 : index
    %c0_10 = arith.constant 0 : index
    %c0_11 = arith.constant 0 : index
    %8 = vector.load %arg2[%c0_9, %c0_10, %c0_11] : memref<3x128x128xf32, #tpu.memory_space<vmem>>, vector<1x128x128xf32>
    %9 = vector.shape_cast %8 : vector<1x128x128xf32> to vector<128x128xf32>
    %cst_12 = arith.constant dense<0.000000e+00> : vector<16x128xf32>
    %10 = tpu.matmul %7, %9, %cst_12 {dimension_numbers = #tpu.dot_dimension_numbers<[1], [0], [0], [1], [0, 0, 1, 1], [], []>} : vector<16x128xf32>, vector<128x128xf32>, vector<16x128xf32> -> vector<16x128xf32>
    %11 = arith.addf %6, %10 : vector<16x128xf32>
    %c1_13 = arith.constant 1 : index
    %c0_14 = arith.constant 0 : index
    %12 = vector.load %arg8[%c1_13, %c0_14] : memref<18x128xf32, #tpu.memory_space<vmem>>, vector<16x128xf32>
    %c1_15 = arith.constant 1 : index
    %c0_16 = arith.constant 0 : index
    %c0_17 = arith.constant 0 : index
    %13 = vector.load %arg2[%c1_15, %c0_16, %c0_17] : memref<3x128x128xf32, #tpu.memory_space<vmem>>, vector<1x128x128xf32>
    %14 = vector.shape_cast %13 : vector<1x128x128xf32> to vector<128x128xf32>
    %cst_18 = arith.constant dense<0.000000e+00> : vector<16x128xf32>
    %15 = tpu.matmul %12, %14, %cst_18 {dimension_numbers = #tpu.dot_dimension_numbers<[1], [0], [0], [1], [0, 0, 1, 1], [], []>} : vector<16x128xf32>, vector<128x128xf32>, vector<16x128xf32> -> vector<16x128xf32>
    %16 = arith.addf %11, %15 : vector<16x128xf32>
    %c2 = arith.constant 2 : index
    %c0_19 = arith.constant 0 : index
    %17 = vector.load %arg8[%c2, %c0_19] : memref<18x128xf32, #tpu.memory_space<vmem>>, vector<16x128xf32>
    %c2_20 = arith.constant 2 : index
    %c0_21 = arith.constant 0 : index
    %c0_22 = arith.constant 0 : index
    %18 = vector.load %arg2[%c2_20, %c0_21, %c0_22] : memref<3x128x128xf32, #tpu.memory_space<vmem>>, vector<1x128x128xf32>
    %19 = vector.shape_cast %18 : vector<1x128x128xf32> to vector<128x128xf32>
    %cst_23 = arith.constant dense<0.000000e+00> : vector<16x128xf32>
    %20 = tpu.matmul %17, %19, %cst_23 {dimension_numbers = #tpu.dot_dimension_numbers<[1], [0], [0], [1], [0, 0, 1, 1], [], []>} : vector<16x128xf32>, vector<128x128xf32>, vector<16x128xf32> -> vector<16x128xf32>
    %21 = arith.addf %16, %20 : vector<16x128xf32>
    %c0_24 = arith.constant 0 : index
    %c0_25 = arith.constant 0 : index
    %22 = vector.load %arg3[%c0_24, %c0_25] : memref<1x128xf32, #tpu.memory_space<vmem>>, vector<1x128xf32>
    %23 = vector.broadcast %22 : vector<1x128xf32> to vector<16x128xf32>
    %24 = arith.addf %21, %23 : vector<16x128xf32>
    %cst_26 = arith.constant 0.000000e+00 : f32
    %25 = vector.broadcast %cst_26 : f32 to vector<16x128xf32>
    %26 = arith.maximumf %24, %25 : vector<16x128xf32>
    %c0_27 = arith.constant 0 : index
    %c0_28 = arith.constant 0 : index
    %27 = vector.load %arg9[%c0_27, %c0_28] : memref<18x128xf32, #tpu.memory_space<vmem>>, vector<1x128xf32>
    tpu.vector_store %arg9[%c0_27, %c0_28], %0 {strides = array<i32>} : memref<18x128xf32, #tpu.memory_space<vmem>>, vector<1x128xf32>,
    %c17_29 = arith.constant 17 : index
    %c0_30 = arith.constant 0 : index
    %28 = vector.load %arg9[%c17_29, %c0_30] : memref<18x128xf32, #tpu.memory_space<vmem>>, vector<1x128xf32>
    tpu.vector_store %arg9[%c17_29, %c0_30], %0 {strides = array<i32>} : memref<18x128xf32, #tpu.memory_space<vmem>>, vector<1x128xf32>,
    %c1_31 = arith.constant 1 : index
    %c0_32 = arith.constant 0 : index
    %29 = vector.load %arg9[%c1_31, %c0_32] : memref<18x128xf32, #tpu.memory_space<vmem>>, vector<16x128xf32>
    tpu.vector_store %arg9[%c1_31, %c0_32], %26 {strides = array<i32>} : memref<18x128xf32, #tpu.memory_space<vmem>>, vector<16x128xf32>,
    %cst_33 = arith.constant 0.000000e+00 : f32
    %30 = vector.broadcast %cst_33 : f32 to vector<16x128xf32>
    %c0_34 = arith.constant 0 : index
    %c0_35 = arith.constant 0 : index
    %31 = vector.load %arg9[%c0_34, %c0_35] : memref<18x128xf32, #tpu.memory_space<vmem>>, vector<16x128xf32>
    %c0_36 = arith.constant 0 : index
    %c0_37 = arith.constant 0 : index
    %c0_38 = arith.constant 0 : index
    %32 = vector.load %arg4[%c0_36, %c0_37, %c0_38] : memref<3x128x128xf32, #tpu.memory_space<vmem>>, vector<1x128x128xf32>
    %33 = vector.shape_cast %32 : vector<1x128x128xf32> to vector<128x128xf32>
    %cst_39 = arith.constant dense<0.000000e+00> : vector<16x128xf32>
    %34 = tpu.matmul %31, %33, %cst_39 {dimension_numbers = #tpu.dot_dimension_numbers<[1], [0], [0], [1], [0, 0, 1, 1], [], []>} : vector<16x128xf32>, vector<128x128xf32>, vector<16x128xf32> -> vector<16x128xf32>
    %35 = arith.addf %30, %34 : vector<16x128xf32>
    %c1_40 = arith.constant 1 : index
    %c0_41 = arith.constant 0 : index
    %36 = vector.load %arg9[%c1_40, %c0_41] : memref<18x128xf32, #tpu.memory_space<vmem>>, vector<16x128xf32>
    %c1_42 = arith.constant 1 : index
    %c0_43 = arith.constant 0 : index
    %c0_44 = arith.constant 0 : index
    %37 = vector.load %arg4[%c1_42, %c0_43, %c0_44] : memref<3x128x128xf32, #tpu.memory_space<vmem>>, vector<1x128x128xf32>
    %38 = vector.shape_cast %37 : vector<1x128x128xf32> to vector<128x128xf32>
    %cst_45 = arith.constant dense<0.000000e+00> : vector<16x128xf32>
    %39 = tpu.matmul %36, %38, %cst_45 {dimension_numbers = #tpu.dot_dimension_numbers<[1], [0], [0], [1], [0, 0, 1, 1], [], []>} : vector<16x128xf32>, vector<128x128xf32>, vector<16x128xf32> -> vector<16x128xf32>
    %40 = arith.addf %35, %39 : vector<16x128xf32>
    %c2_46 = arith.constant 2 : index
    %c0_47 = arith.constant 0 : index
    %41 = vector.load %arg9[%c2_46, %c0_47] : memref<18x128xf32, #tpu.memory_space<vmem>>, vector<16x128xf32>
    %c2_48 = arith.constant 2 : index
    %c0_49 = arith.constant 0 : index
    %c0_50 = arith.constant 0 : index
    %42 = vector.load %arg4[%c2_48, %c0_49, %c0_50] : memref<3x128x128xf32, #tpu.memory_space<vmem>>, vector<1x128x128xf32>
    %43 = vector.shape_cast %42 : vector<1x128x128xf32> to vector<128x128xf32>
    %cst_51 = arith.constant dense<0.000000e+00> : vector<16x128xf32>
    %44 = tpu.matmul %41, %43, %cst_51 {dimension_numbers = #tpu.dot_dimension_numbers<[1], [0], [0], [1], [0, 0, 1, 1], [], []>} : vector<16x128xf32>, vector<128x128xf32>, vector<16x128xf32> -> vector<16x128xf32>
    %45 = arith.addf %40, %44 : vector<16x128xf32>
    %c0_52 = arith.constant 0 : index
    %c0_53 = arith.constant 0 : index
    %46 = vector.load %arg5[%c0_52, %c0_53] : memref<1x128xf32, #tpu.memory_space<vmem>>, vector<1x128xf32>
    %47 = vector.broadcast %46 : vector<1x128xf32> to vector<16x128xf32>
    %48 = arith.addf %45, %47 : vector<16x128xf32>
    %c0_54 = arith.constant 0 : index
    %c0_55 = arith.constant 0 : index
    %c0_56 = arith.constant 0 : index
    %49 = vector.load %arg1[%c0_54, %c0_55, %c0_56] : memref<1x16x128xf32, #tpu.memory_space<vmem>>, vector<1x16x128xf32>
    %50 = vector.shape_cast %49 : vector<1x16x128xf32> to vector<16x128xf32>
    %51 = arith.addf %48, %50 : vector<16x128xf32>
    %c0_57 = arith.constant 0 : index
    %c0_58 = arith.constant 0 : index
    %c0_59 = arith.constant 0 : index
    %52 = vector.load %arg6[%c0_57, %c0_58, %c0_59] : memref<1x16x128xf32, #tpu.memory_space<vmem>>, vector<1x16x128xf32>
    %53 = vector.shape_cast %52 : vector<1x16x128xf32> to vector<16x128xf32>
    %54 = vector.shape_cast %51 : vector<16x128xf32> to vector<1x16x128xf32>
    tpu.vector_store %arg6[%c0_57, %c0_58, %c0_59], %54 {strides = array<i32>} : memref<1x16x128xf32, #tpu.memory_space<vmem>>, vector<1x16x128xf32>,
    %cst_60 = arith.constant 0.000000e+00 : f32
    %55 = vector.broadcast %cst_60 : f32 to vector<16x128xf32>
    %56 = arith.maximumf %51, %55 : vector<16x128xf32>
    %c0_61 = arith.constant 0 : index
    %c0_62 = arith.constant 0 : index
    %c0_63 = arith.constant 0 : index
    %57 = vector.load %arg7[%c0_61, %c0_62, %c0_63] : memref<1x16x128xf32, #tpu.memory_space<vmem>>, vector<1x16x128xf32>
    %58 = vector.shape_cast %57 : vector<1x16x128xf32> to vector<16x128xf32>
    %59 = vector.shape_cast %56 : vector<16x128xf32> to vector<1x16x128xf32>
    tpu.vector_store %arg7[%c0_61, %c0_62, %c0_63], %59 {strides = array<i32>} : memref<1x16x128xf32, #tpu.memory_space<vmem>>, vector<1x16x128xf32>,
    return
  }
  func.func @transform_0(%arg0: i32) -> (i32, i32, i32) {
    %c0_i32 = arith.constant 0 : i32
    %c0_i32_0 = arith.constant 0 : i32
    %c0_i32_1 = arith.constant 0 : i32
    return %arg0, %c0_i32, %c0_i32_0 : i32, i32, i32
  }
  func.func @transform_1(%arg0: i32) -> (i32, i32, i32) {
    %c0_i32 = arith.constant 0 : i32
    %c0_i32_0 = arith.constant 0 : i32
    %c0_i32_1 = arith.constant 0 : i32
    %c0_i32_2 = arith.constant 0 : i32
    return %c0_i32, %c0_i32_0, %c0_i32_1 : i32, i32, i32
  }
  func.func @transform_2(%arg0: i32) -> (i32, i32) {
    %c0_i32 = arith.constant 0 : i32
    %c0_i32_0 = arith.constant 0 : i32
    %c0_i32_1 = arith.constant 0 : i32
    return %c0_i32, %c0_i32_0 : i32, i32
  }
  func.func @transform_3(%arg0: i32) -> (i32, i32, i32) {
    %c0_i32 = arith.constant 0 : i32
    %c0_i32_0 = arith.constant 0 : i32
    %c0_i32_1 = arith.constant 0 : i32
    %c0_i32_2 = arith.constant 0 : i32
    return %c0_i32, %c0_i32_0, %c0_i32_1 : i32, i32, i32
  }
  func.func @transform_4(%arg0: i32) -> (i32, i32) {
    %c0_i32 = arith.constant 0 : i32
    %c0_i32_0 = arith.constant 0 : i32
    %c0_i32_1 = arith.constant 0 : i32
    return %c0_i32, %c0_i32_0 : i32, i32
  }
  func.func @transform_5(%arg0: i32) -> (i32, i32, i32) {
    %c0_i32 = arith.constant 0 : i32
    %c0_i32_0 = arith.constant 0 : i32
    %c0_i32_1 = arith.constant 0 : i32
    return %arg0, %c0_i32, %c0_i32_0 : i32, i32, i32
  }
  func.func @transform_6(%arg0: i32) -> (i32, i32, i32) {
    %c0_i32 = arith.constant 0 : i32
    %c0_i32_0 = arith.constant 0 : i32
    %c0_i32_1 = arith.constant 0 : i32
    return %arg0, %c0_i32, %c0_i32_0 : i32, i32, i32
  }
}

</mosaic_0001>

<llo_original>
// kernel: tile.13
$region0: #{tile.13}
  #allocation0 [shape = 's32[1]{0}', space=sflag, size = 0x4, scoped, tag = 'scoped memory for tile.13']
  %s0 = inlined_call_operand.vmem [shape: f32[8], index: 0, kind: input, shape index: {}]
  %s1 = inlined_call_operand.vmem [shape: f32[16,8], index: 1, kind: output, shape index: {}]
  // Predicated region
  $region2: #{tile.13} parent=0 // pred_check
    _
  $region3: #{tile.13} parent=0 // pred_check_branch
    %3 = sbr.rel (0) target = $region5
  $region4: #{tile.13} parent=0 // pred_region
    _
  $region5: #{tile.13} parent=0 // pred_fallthru
    _
  %v4 = vld [vmem:[%s0] ss:$0 sm:$0xff]
  %5 = vst [vmem:[%s1] sm:$0xff] %v4
  %s6 = scalar_lea.vmem %s1, 8
  %7 = vst [vmem:[%s6] sm:$0xff] %v4

// kernel: tile.14
$region0: #{tile.14}
  %s0 = inlined_call_operand.vmem [shape: f32[16,8], index: 0, kind: input, shape index: {}]
  %s1 = inlined_call_operand.vmem [shape: f32[1,128], index: 1, kind: output, shape index: {}]
  $region1: #{tile.14} parent=0
    #allocation0 [shape = 'u8[4096]{0}', space=vmem, size = 0x1000, scoped, tag = 'scoped mem for output reshape']
    %v2 = vld [vmem:[%s0] sm:$0x1]
    %vm3 = vcmask 64512
    %4 = vst.msk [vmem:[#allocation0] sm:$0x1] %vm3, %v2
    %s5 = scalar_lea.vmem %s0, 15
    %v6 = vld [vmem:[%s5] sm:$0x1]
    %7 = vrot.lane.b32.xlu0 %v6, 120
    %v8 = vpop.permute.xlu0 %7
    %vm9 = vcmask 1048512
    %10 = vst.msk [vmem:[#allocation0] sm:$0x1] %vm9, %v8
    %s11 = scalar_lea.vmem %s0, 14
    %v12 = vld [vmem:[%s11] sm:$0x1]
    %13 = vrot.lane.b32.xlu0 %v12, 112
    %v14 = vpop.permute.xlu0 %13
    %vm15 = vcmask 982912
    %16 = vst.msk [vmem:[#allocation0] sm:$0x1] %vm15, %v14
    %s17 = scalar_lea.vmem %s0, 13
    %v18 = vld [vmem:[%s17] sm:$0x1]
    %19 = vrot.lane.b32.xlu0 %v18, 104
    %v20 = vpop.permute.xlu0 %19
    %vm21 = vcmask 917312
    %22 = vst.msk [vmem:[#allocation0] sm:$0x1] %vm21, %v20
    %s23 = scalar_lea.vmem %s0, 12
    %v24 = vld [vmem:[%s23] sm:$0x1]
    %25 = vrot.lane.b32.xlu0 %v24, 96
    %v26 = vpop.permute.xlu0 %25
    %vm27 = vcmask 851712
    %28 = vst.msk [vmem:[#allocation0] sm:$0x1] %vm27, %v26
    %s29 = scalar_lea.vmem %s0, 11
    %v30 = vld [vmem:[%s29] sm:$0x1]
    %31 = vrot.lane.b32.xlu0 %v30, 88
    %v32 = vpop.permute.xlu0 %31
    %vm33 = vcmask 786112
    %34 = vst.msk [vmem:[#allocation0] sm:$0x1] %vm33, %v32
    %s35 = scalar_lea.vmem %s0, 10
    %v36 = vld [vmem:[%s35] sm:$0x1]
    %37 = vrot.lane.b32.xlu0 %v36, 80
    %v38 = vpop.permute.xlu0 %37
    %vm39 = vcmask 720512
    %40 = vst.msk [vmem:[#allocation0] sm:$0x1] %vm39, %v38
    %s41 = scalar_lea.vmem %s0, 9
    %v42 = vld [vmem:[%s41] sm:$0x1]
    %43 = vrot.lane.b32.xlu0 %v42, 72
    %v44 = vpop.permute.xlu0 %43
    %vm45 = vcmask 654912
    %46 = vst.msk [vmem:[#allocation0] sm:$0x1] %vm45, %v44
    %s47 = scalar_lea.vmem %s0, 8
    %v48 = vld [vmem:[%s47] sm:$0x1]
    %49 = vrot.lane.b32.xlu0 %v48, 64
    %v50 = vpop.permute.xlu0 %49
    %vm51 = vcmask 589312
    %52 = vst.msk [vmem:[#allocation0] sm:$0x1] %vm51, %v50
    %s53 = scalar_lea.vmem %s0, 7
    %v54 = vld [vmem:[%s53] sm:$0x1]
    %55 = vrot.lane.b32.xlu0 %v54, 56
    %v56 = vpop.permute.xlu0 %55
    %vm57 = vcmask 523712
    %58 = vst.msk [vmem:[#allocation0] sm:$0x1] %vm57, %v56
    %s59 = scalar_lea.vmem %s0, 6
    %v60 = vld [vmem:[%s59] sm:$0x1]
    %61 = vrot.lane.b32.xlu0 %v60, 48
    %v62 = vpop.permute.xlu0 %61
    %vm63 = vcmask 458112
    %64 = vst.msk [vmem:[#allocation0] sm:$0x1] %vm63, %v62
    %s65 = scalar_lea.vmem %s0, 5
    %v66 = vld [vmem:[%s65] sm:$0x1]
    %67 = vrot.lane.b32.xlu0 %v66, 40
    %v68 = vpop.permute.xlu0 %67
    %vm69 = vcmask 392512
    %70 = vst.msk [vmem:[#allocation0] sm:$0x1] %vm69, %v68
    %s71 = scalar_lea.vmem %s0, 4
    %v72 = vld [vmem:[%s71] sm:$0x1]
    %73 = vrot.lane.b32.xlu0 %v72, 32
    %v74 = vpop.permute.xlu0 %73
    %vm75 = vcmask 326912
    %76 = vst.msk [vmem:[#allocation0] sm:$0x1] %vm75, %v74
    %s77 = scalar_lea.vmem %s0, 3
    %v78 = vld [vmem:[%s77] sm:$0x1]
    %79 = vrot.lane.b32.xlu0 %v78, 24
    %v80 = vpop.permute.xlu0 %79
    %vm81 = vcmask 261312
    %82 = vst.msk [vmem:[#allocation0] sm:$0x1] %vm81, %v80
    %s83 = scalar_lea.vmem %s0, 2
    %v84 = vld [vmem:[%s83] sm:$0x1]
    %85 = vrot.lane.b32.xlu0 %v84, 16
    %v86 = vpop.permute.xlu0 %85
    %vm87 = vcmask 195712
    %88 = vst.msk [vmem:[#allocation0] sm:$0x1] %vm87, %v86
    %s89 = scalar_lea.vmem %s0, 1
    %v90 = vld [vmem:[%s89] sm:$0x1]
    %91 = vrot.lane.b32.xlu0 %v90, 8
    %v92 = vpop.permute.xlu0 %91
    %vm93 = vcmask 130112
    %94 = vst.msk [vmem:[#allocation0] sm:$0x1] %vm93, %v92
    %s96 = sshllo.u32 0, 1
    %v98 = vld [vmem:[#allocation0] sm:%s96]
    %s99 = sshllo.u32 0, 1
    %100 = vst [vmem:[%s1] sm:%s99] %v98

// kernel: basic_block_forward.1
$region0: #{basic_block_forward.1}
  #allocation0 [shape = 'u32[]', space=smem, size = 0x4, offset = 0x4, fixed_abs, tag = 'smem constant byte address 0x4 - core index']
  #allocation1 [shape = 'u32[144,128]{1,0:T(1,128)}', space=vmem, size = 0x12000, scoped, tag = 'internal scratch']
  #allocation2 [shape = 'f32[18,128]{1,0:T(8,128)}', space=vmem, size = 0x3000, scoped, tag = 'scratch operand']
  #allocation3 [shape = 'f32[18,128]{1,0:T(8,128)}', space=vmem, size = 0x3000, scoped, tag = 'scratch operand']
  %s0 = inlined_call_operand.vmem [shape: f32[2,16,128], index: 0, kind: input, shape index: {}]
  %s1 = inlined_call_operand.vmem [shape: f32[3,128,128], index: 1, kind: input, shape index: {}]
  %s2 = inlined_call_operand.vmem [shape: f32[1,128], index: 2, kind: input, shape index: {}]
  %s3 = inlined_call_operand.vmem [shape: f32[3,128,128], index: 3, kind: input, shape index: {}]
  %s4 = inlined_call_operand.vmem [shape: f32[1,128], index: 4, kind: input, shape index: {}]
  %s5 = inlined_call_operand.vmem [shape: f32[2,16,128], index: 5, kind: output, shape index: {0}]
  %s6 = inlined_call_operand.vmem [shape: f32[2,16,128], index: 6, kind: output, shape index: {1}]
  %7 = xla_tuple %s5, %s6
  %s8 = sld [smem:[#allocation0]]
  $region61: #{basic_block_forward.1} parent=0
    _
  %s10 = ssub.s32 1, %s8
  %s11 = scalar_select 0, %s10, %s8
  loop: start=0, step=1, limit=4
  $region2: #{basic_block_forward.1} parent=0 // loop_pre_header
    _
  $region3: #{basic_block_forward.1} parent=0 // loop_header
    %s13 = sphi 0, %s17
    %p14 = scmp.ge.s32.totalorder %s13, 4
    %s23 = sphi 0, %s25
    %s26 = sphi 0, %s23
    %s27 = sphi 0, %s26
    %s43 = sphi 0, %s27
    %s47 = sphi 0, %s47
    %s49 = sphi 0, %s47
    %s50 = sphi 0, %s49
    %s64 = sphi 0, %s50
    %s68 = sphi 0, %s68
    %s70 = sphi 0, %s68
    %s71 = sphi 0, %s70
    %s85 = sphi 0, %s71
    %s89 = sphi 0, %s89
    %s91 = sphi 0, %s89
    %s92 = sphi 0, %s91
    %s106 = sphi 0, %s92
    %s110 = sphi 0, %s110
    %s112 = sphi 0, %s110
    %s113 = sphi 0, %s112
    %s127 = sphi 0, %s113
    %s133 = sphi 0, %s135
    %s136 = sphi 0, %s133
    %s137 = sphi 0, %s136
    %s153 = sphi 0, %s137
    %s159 = sphi 0, %s161
    %s162 = sphi 0, %s159
    %s163 = sphi 0, %s162
    %s179 = sphi 0, %s163
  $region4: #{basic_block_forward.1} parent=0 // loop_header_branch
    %16 = sbr.rel (%p14) target = $region8
  $region5: #{basic_block_forward.1} parent=0 // loop_body
    %s18 = ssub.s32 %s13, 1
    %s19 = ssub.s32 %s13, 2
    %s20 = sadd.s32 %s13, 1
    %s21 = ssub.s32 %s13, %s20
    %p22 = scmp.eq.s32.totalorder %s21, 0
    %s24 = sadd.s32 %s23, 1
    %s25 = scalar_select %p22, %s23, %s24
    %p28 = pneg %p22
    %p29 = scmp.eq.s32.totalorder %s13, 1
    %p30 = por %p28, %p29
    %p31 = scmp.ne.s32.totalorder %s23, %s26
    %p32 = scmp.eq.s32.totalorder %s13, 0
    %p33 = por %p31, %p32
    %p34 = scmp.ne.s32.totalorder %s23, %s26
    %p35 = scmp.eq.s32.totalorder %s18, 1
    %p36 = por %p34, %p35
    %p37 = scmp.ne.s32.totalorder %s26, %s27
    %p38 = scmp.eq.s32.totalorder %s18, 0
    %p39 = por %p37, %p38
    %p40 = scmp.ne.s32.totalorder %s26, %s27
    %p41 = scmp.eq.s32.totalorder %s19, 1
    %p42 = por %p40, %p41
    %p44 = scmp.ne.s32.totalorder %s27, %s43
    %p45 = scmp.eq.s32.totalorder %s19, 0
    %p46 = por %p44, %p45
    %s48 = sadd.s32 %s47, 1
    %p51 = scmp.eq.s32.totalorder %s13, 1
    %p52 = scmp.ne.s32.totalorder %s47, %s49
    %p53 = scmp.eq.s32.totalorder %s13, 0
    %p54 = por %p52, %p53
    %p55 = scmp.ne.s32.totalorder %s47, %s49
    %p56 = scmp.eq.s32.totalorder %s18, 1
    %p57 = por %p55, %p56
    %p58 = scmp.ne.s32.totalorder %s49, %s50
    %p59 = scmp.eq.s32.totalorder %s18, 0
    %p60 = por %p58, %p59
    %p61 = scmp.ne.s32.totalorder %s49, %s50
    %p62 = scmp.eq.s32.totalorder %s19, 1
    %p63 = por %p61, %p62
    %p65 = scmp.ne.s32.totalorder %s50, %s64
    %p66 = scmp.eq.s32.totalorder %s19, 0
    %p67 = por %p65, %p66
    %s69 = sadd.s32 %s68, 1
    %p72 = scmp.eq.s32.totalorder %s13, 1
    %p73 = scmp.ne.s32.totalorder %s68, %s70
    %p74 = scmp.eq.s32.totalorder %s13, 0
    %p75 = por %p73, %p74
    %p76 = scmp.ne.s32.totalorder %s68, %s70
    %p77 = scmp.eq.s32.totalorder %s18, 1
    %p78 = por %p76, %p77
    %p79 = scmp.ne.s32.totalorder %s70, %s71
    %p80 = scmp.eq.s32.totalorder %s18, 0
    %p81 = por %p79, %p80
    %p82 = scmp.ne.s32.totalorder %s70, %s71
    %p83 = scmp.eq.s32.totalorder %s19, 1
    %p84 = por %p82, %p83
    %p86 = scmp.ne.s32.totalorder %s71, %s85
    %p87 = scmp.eq.s32.totalorder %s19, 0
    %p88 = por %p86, %p87
    %s90 = sadd.s32 %s89, 1
    %p93 = scmp.eq.s32.totalorder %s13, 1
    %p94 = scmp.ne.s32.totalorder %s89, %s91
    %p95 = scmp.eq.s32.totalorder %s13, 0
    %p96 = por %p94, %p95
    %p97 = scmp.ne.s32.totalorder %s89, %s91
    %p98 = scmp.eq.s32.totalorder %s18, 1
    %p99 = por %p97, %p98
    %p100 = scmp.ne.s32.totalorder %s91, %s92
    %p101 = scmp.eq.s32.totalorder %s18, 0
    %p102 = por %p100, %p101
    %p103 = scmp.ne.s32.totalorder %s91, %s92
    %p104 = scmp.eq.s32.totalorder %s19, 1
    %p105 = por %p103, %p104
    %p107 = scmp.ne.s32.totalorder %s92, %s106
    %p108 = scmp.eq.s32.totalorder %s19, 0
    %p109 = por %p107, %p108
    %s111 = sadd.s32 %s110, 1
    %p114 = scmp.eq.s32.totalorder %s13, 1
    %p115 = scmp.ne.s32.totalorder %s110, %s112
    %p116 = scmp.eq.s32.totalorder %s13, 0
    %p117 = por %p115, %p116
    %p118 = scmp.ne.s32.totalorder %s110, %s112
    %p119 = scmp.eq.s32.totalorder %s18, 1
    %p120 = por %p118, %p119
    %p121 = scmp.ne.s32.totalorder %s112, %s113
    %p122 = scmp.eq.s32.totalorder %s18, 0
    %p123 = por %p121, %p122
    %p124 = scmp.ne.s32.totalorder %s112, %s113
    %p125 = scmp.eq.s32.totalorder %s19, 1
    %p126 = por %p124, %p125
    %p128 = scmp.ne.s32.totalorder %s113, %s127
    %p129 = scmp.eq.s32.totalorder %s19, 0
    %p130 = por %p128, %p129
    %s131 = ssub.s32 %s13, %s20
    %p132 = scmp.eq.s32.totalorder %s131, 0
    %s134 = sadd.s32 %s133, 1
    %s135 = scalar_select %p132, %s133, %s134
    %p138 = pneg %p132
    %p139 = scmp.eq.s32.totalorder %s13, 1
    %p140 = por %p138, %p139
    %p141 = scmp.ne.s32.totalorder %s133, %s136
    %p142 = scmp.eq.s32.totalorder %s13, 0
    %p143 = por %p141, %p142
    %p144 = scmp.ne.s32.totalorder %s133, %s136
    %p145 = scmp.eq.s32.totalorder %s18, 1
    %p146 = por %p144, %p145
    %p147 = scmp.ne.s32.totalorder %s136, %s137
    %p148 = scmp.eq.s32.totalorder %s18, 0
    %p149 = por %p147, %p148
    %p150 = scmp.ne.s32.totalorder %s136, %s137
    %p151 = scmp.eq.s32.totalorder %s19, 1
    %p152 = por %p150, %p151
    %p154 = scmp.ne.s32.totalorder %s137, %s153
    %p155 = scmp.eq.s32.totalorder %s19, 0
    %p156 = por %p154, %p155
    %s157 = ssub.s32 %s13, %s20
    %p158 = scmp.eq.s32.totalorder %s157, 0
    %s160 = sadd.s32 %s159, 1
    %s161 = scalar_select %p158, %s159, %s160
    %p164 = pneg %p158
    %p165 = scmp.eq.s32.totalorder %s13, 1
    %p166 = por %p164, %p165
    %p167 = scmp.ne.s32.totalorder %s159, %s162
    %p168 = scmp.eq.s32.totalorder %s13, 0
    %p169 = por %p167, %p168
    %p170 = scmp.ne.s32.totalorder %s159, %s162
    %p171 = scmp.eq.s32.totalorder %s18, 1
    %p172 = por %p170, %p171
    %p173 = scmp.ne.s32.totalorder %s162, %s163
    %p174 = scmp.eq.s32.totalorder %s18, 0
    %p175 = por %p173, %p174
    %p176 = scmp.ne.s32.totalorder %s162, %s163
    %p177 = scmp.eq.s32.totalorder %s19, 1
    %p178 = por %p176, %p177
    %p180 = scmp.ne.s32.totalorder %s163, %s179
    %p181 = scmp.eq.s32.totalorder %s19, 0
    %p182 = por %p180, %p181
    %p183 = scmp.le.s32.totalorder 1, %s13
    %p184 = scmp.lt.s32.totalorder %s13, 3
    %p185 = pnand %p183, %p184
    %p186 = pneg %p185
    // Predicated region
    $region9: #{basic_block_forward.1} parent=5 // pred_check
      _
    $region10: #{basic_block_forward.1} parent=5 // pred_check_branch
      %188 = sbr.rel (%p185) target = $region12
    $region11: #{basic_block_forward.1} parent=5 // pred_region
      %s189 = ssub.s32 %s13, 1
      // Predicated region
      $region13: #{basic_block_forward.1} parent=11 // pred_check
        %p190 = pneg %p60
      $region14: #{basic_block_forward.1} parent=11 // pred_check_branch
        %192 = sbr.rel (%p190) target = $region16
      $region15: #{basic_block_forward.1} parent=11 // pred_region
        _
      $region16: #{basic_block_forward.1} parent=11 // pred_fallthru
        _
      // Predicated region
      $region17: #{basic_block_forward.1} parent=11 // pred_check
        %p193 = pneg %p81
      $region18: #{basic_block_forward.1} parent=11 // pred_check_branch
        %195 = sbr.rel (%p193) target = $region20
      $region19: #{basic_block_forward.1} parent=11 // pred_region
        _
      $region20: #{basic_block_forward.1} parent=11 // pred_fallthru
        _
      // Predicated region
      $region21: #{basic_block_forward.1} parent=11 // pred_check
        %p196 = pneg %p102
      $region22: #{basic_block_forward.1} parent=11 // pred_check_branch
        %198 = sbr.rel (%p196) target = $region24
      $region23: #{basic_block_forward.1} parent=11 // pred_region
        _
      $region24: #{basic_block_forward.1} parent=11 // pred_fallthru
        _
      // Predicated region
      $region25: #{basic_block_forward.1} parent=11 // pred_check
        %p199 = pneg %p123
      $region26: #{basic_block_forward.1} parent=11 // pred_check_branch
        %201 = sbr.rel (%p199) target = $region28
      $region27: #{basic_block_forward.1} parent=11 // pred_region
        _
      $region28: #{basic_block_forward.1} parent=11 // pred_fallthru
        _
    $region12: #{basic_block_forward.1} parent=5 // pred_fallthru
      _
    %p202 = scmp.lt.s32.totalorder %s13, 2
    // Predicated region
    $region29: #{basic_block_forward.1} parent=5 // pred_check
      %p203 = pneg %p202
    $region30: #{basic_block_forward.1} parent=5 // pred_check_branch
      %205 = sbr.rel (%p203) target = $region32
    $region31: #{basic_block_forward.1} parent=5 // pred_region
      // Predicated region
      $region33: #{basic_block_forward.1} parent=31 // pred_check
        %p206 = pneg %p33
      $region34: #{basic_block_forward.1} parent=31 // pred_check_branch
        %208 = sbr.rel (%p206) target = $region36
      $region35: #{basic_block_forward.1} parent=31 // pred_region
        %p209 = scmp.lt.s32.totalorder %s13, 1
        %s210 = scalar_select %p209, %s13, 1
        %s211 = smul.addr %s210, 2
        %s212 = smul.addr %s211, 8
        %s213 = scalar_lea.vmem %s0, %s212
      $region36: #{basic_block_forward.1} parent=31 // pred_fallthru
        _
    $region32: #{basic_block_forward.1} parent=5 // pred_fallthru
      _
    %p214 = scmp.le.s32.totalorder 1, %s13
    %p215 = scmp.lt.s32.totalorder %s13, 3
    %p216 = pnand %p214, %p215
    %p217 = pneg %p216
    // Predicated region
    $region37: #{basic_block_forward.1} parent=5 // pred_check
      _
    $region38: #{basic_block_forward.1} parent=5 // pred_check_branch
      %219 = sbr.rel (%p216) target = $region40
    $region39: #{basic_block_forward.1} parent=5 // pred_region
      %s220 = ssub.s32 %s13, 1
      %p221 = scmp.lt.s32.totalorder %s18, 1
      %s222 = scalar_select %p221, %s18, 1
      %s223 = smul.addr %s222, 2
      %s224 = smul.addr %s223, 8
      %s225 = scalar_lea.vmem %s0, %s224
      %p226 = pneg %p39
      %p227 = pneg %p36
      %p228 = pneg %p60
      %p229 = pneg %p57
      %p230 = pneg %p81
      %p231 = pneg %p78
      %p232 = pneg %p102
      %p233 = pneg %p99
      %p234 = pneg %p123
      %p235 = pneg %p120
      %p236 = pneg %p149
      %p237 = pneg %p146
      %p238 = scmp.lt.s32.totalorder %s18, 1
      %s239 = scalar_select %p238, %s18, 1
      %s240 = smul.addr %s239, 2
      %s241 = smul.addr %s240, 8
      %s242 = scalar_lea.vmem %s5, %s241
      %p243 = pneg %p175
      %p244 = pneg %p172
      %p245 = scmp.lt.s32.totalorder %s18, 1
      %s246 = scalar_select %p245, %s18, 1
      %s247 = smul.addr %s246, 2
      %s248 = smul.addr %s247, 8
      %s249 = scalar_lea.vmem %s6, %s248
      %p250 = scmp.lt.s32.totalorder %s18, 1
      %s251 = scalar_select %p250, %s18, 1
      %s252 = smul.addr %s251, 2
      %s253 = smul.addr %s252, 8
      %s254 = scalar_lea.vmem %s0, %s253
      %p255 = scmp.lt.s32.totalorder %s18, 1
      %s256 = scalar_select %p255, %s18, 1
      %s257 = smul.addr %s256, 2
      %s258 = smul.addr %s257, 8
      %s259 = scalar_lea.vmem %s5, %s258
      %p260 = scmp.lt.s32.totalorder %s18, 1
      %s261 = scalar_select %p260, %s18, 1
      %s262 = smul.addr %s261, 2
      %s263 = smul.addr %s262, 8
      %s264 = scalar_lea.vmem %s6, %s263
      %265 = vst [vmem:[#allocation2] sm:$0x1] 0.0
      %266 = vst [vmem:[#allocation2 + $0x11] sm:$0x1] 0.0
      %v267 = vld [vmem:[%s254] sm:$0xff]
      %v268 = vld [vmem:[%s254 + $0x8] sm:$0xff]
      %269 = vst [vmem:[#allocation2 + $0x1] sm:$0xff] %v267
      %270 = vst [vmem:[#allocation2 + $0x9] sm:$0xff] %v268
      %v271 = vld [vmem:[#allocation2] sm:$0xff]
      %v272 = vld [vmem:[#allocation2 + $0x8] sm:$0xff]
      %v273 = vld [vmem:[%s1] sm:$0xff]
      %v274 = vld [vmem:[%s1 + $0x8] sm:$0xff]
      %v275 = vld [vmem:[%s1 + $0x10] sm:$0xff]
      %v276 = vld [vmem:[%s1 + $0x18] sm:$0xff]
      %v277 = vld [vmem:[%s1 + $0x20] sm:$0xff]
      %v278 = vld [vmem:[%s1 + $0x28] sm:$0xff]
      %v279 = vld [vmem:[%s1 + $0x30] sm:$0xff]
      %v280 = vld [vmem:[%s1 + $0x38] sm:$0xff]
      %v281 = vld [vmem:[%s1 + $0x40] sm:$0xff]
      %v282 = vld [vmem:[%s1 + $0x48] sm:$0xff]
      %v283 = vld [vmem:[%s1 + $0x50] sm:$0xff]
      %v284 = vld [vmem:[%s1 + $0x58] sm:$0xff]
      %v285 = vld [vmem:[%s1 + $0x60] sm:$0xff]
      %v286 = vld [vmem:[%s1 + $0x68] sm:$0xff]
      %v287 = vld [vmem:[%s1 + $0x70] sm:$0xff]
      %v288 = vld [vmem:[%s1 + $0x78] sm:$0xff]
      %v289 = vld [vmem:[#allocation2 + $0x1] sm:$0xff]
      %v290 = vld [vmem:[#allocation2 + $0x9] sm:$0xff]
      %s291 = scalar_lea.vmem %s1, 128
      %v292 = vld [vmem:[%s291] sm:$0xff]
      %v293 = vld [vmem:[%s291 + $0x8] sm:$0xff]
      %v294 = vld [vmem:[%s291 + $0x10] sm:$0xff]
      %v295 = vld [vmem:[%s291 + $0x18] sm:$0xff]
      %v296 = vld [vmem:[%s291 + $0x20] sm:$0xff]
      %v297 = vld [vmem:[%s291 + $0x28] sm:$0xff]
      %v298 = vld [vmem:[%s291 + $0x30] sm:$0xff]
      %v299 = vld [vmem:[%s291 + $0x38] sm:$0xff]
      %v300 = vld [vmem:[%s291 + $0x40] sm:$0xff]
      %v301 = vld [vmem:[%s291 + $0x48] sm:$0xff]
      %v302 = vld [vmem:[%s291 + $0x50] sm:$0xff]
      %v303 = vld [vmem:[%s291 + $0x58] sm:$0xff]
      %v304 = vld [vmem:[%s291 + $0x60] sm:$0xff]
      %v305 = vld [vmem:[%s291 + $0x68] sm:$0xff]
      %v306 = vld [vmem:[%s291 + $0x70] sm:$0xff]
      %v307 = vld [vmem:[%s291 + $0x78] sm:$0xff]
      %308 = vmatprep.subr.mxu0 0.0
      %309 = vmatpush1.msra.mxu0 %v292
      %310 = vmatprep.subr.mxu0 0.0
      %311 = vmatpush1.msra.mxu0 %v293
      %312 = vmatprep.subr.mxu0 0.0
      %313 = vmatpush1.msra.mxu0 %v294
      %314 = vmatprep.subr.mxu0 0.0
      %315 = vmatpush1.msra.mxu0 %v295
      %316 = vmatprep.subr.mxu0 0.0
      %317 = vmatpush1.msra.mxu0 %v296
      %318 = vmatprep.subr.mxu0 0.0
      %319 = vmatpush1.msra.mxu0 %v297
      %320 = vmatprep.subr.mxu0 0.0
      %321 = vmatpush1.msra.mxu0 %v298
      %322 = vmatprep.subr.mxu0 0.0
      %323 = vmatpush1.msra.mxu0 %v299
      %324 = vmatprep.subr.mxu0 0.0
      %325 = vmatpush1.msra.mxu0 %v300
      %326 = vmatprep.subr.mxu0 0.0
      %327 = vmatpush1.msra.mxu0 %v301
      %328 = vmatprep.subr.mxu0 0.0
      %329 = vmatpush1.msra.mxu0 %v302
      %330 = vmatprep.subr.mxu0 0.0
      %331 = vmatpush1.msra.mxu0 %v303
      %332 = vmatprep.subr.mxu0 0.0
      %333 = vmatpush1.msra.mxu0 %v304
      %334 = vmatprep.subr.mxu0 0.0
      %335 = vmatpush1.msra.mxu0 %v305
      %336 = vmatprep.subr.mxu0 0.0
      %337 = vmatpush1.msra.mxu0 %v306
      %338 = vmatprep.subr.mxu0 0.0
      %339 = vmatpush1.msra.mxu0 %v307
      %340 = vmatprep.subr.mxu0 0.0
      %341 = vmatpush1.msra.mxu0 0.0
      %342 = vmatprep.subr.mxu0 0.0
      %343 = vmatpush1.msra.mxu0 0.0
      %344 = vmatprep.subr.mxu0 0.0
      %345 = vmatpush1.msra.mxu0 0.0
      %346 = vmatprep.subr.mxu0 0.0
      %347 = vmatpush1.msra.mxu0 0.0
      %348 = vmatprep.subr.mxu0 0.0
      %349 = vmatpush1.msra.mxu0 0.0
      %350 = vmatprep.subr.mxu0 0.0
      %351 = vmatpush1.msra.mxu0 0.0
      %352 = vmatprep.subr.mxu0 0.0
      %353 = vmatpush1.msra.mxu0 0.0
      %354 = vmatprep.subr.mxu0 0.0
      %355 = vmatpush1.msra.mxu0 0.0
      %356 = vmatprep.subr.mxu0 0.0
      %357 = vmatpush1.msra.mxu0 0.0
      %358 = vmatprep.subr.mxu0 0.0
      %359 = vmatpush1.msra.mxu0 0.0
      %360 = vmatprep.subr.mxu0 0.0
      %361 = vmatpush1.msra.mxu0 0.0
      %362 = vmatprep.subr.mxu0 0.0
      %363 = vmatpush1.msra.mxu0 0.0
      %364 = vmatprep.subr.mxu0 0.0
      %365 = vmatpush1.msra.mxu0 0.0
      %366 = vmatprep.subr.mxu0 0.0
      %367 = vmatpush1.msra.mxu0 0.0
      %368 = vmatprep.subr.mxu0 0.0
      %369 = vmatpush1.msra.mxu0 0.0
      %370 = vmatprep.subr.mxu0 0.0
      %371 = vmatpush1.msra.mxu0 0.0
      %372 = vmatprep.mubr.f32.mxu0 0.0
      %373 = vmatmul.mubr.f32.gmra.mrb[0].mxu0 %v289
      %v374 = vpop.f32.mrb[0].mxu0
      %v375 = vadd.f32 0.0, %v374
      %v376 = vpop.f32.mrb[0].mxu0
      %377 = vmatprep.mubr.f32.mxu0 0.0
      %378 = vmatmul.mubr.f32.gmra.mrb[0].mxu0 %v290
      %v379 = vpop.f32.mrb[0].mxu0
      %v380 = vadd.f32 0.0, %v379
      %v381 = vpop.f32.mrb[0].mxu0
      %382 = vdwg.mxu0
      %383 = vmatprep.subr.mxu0 0.0
      %384 = vmatpush1.msra.mxu0 %v273
      %385 = vmatprep.subr.mxu0 0.0
      %386 = vmatpush1.msra.mxu0 %v274
      %387 = vmatprep.subr.mxu0 0.0
      %388 = vmatpush1.msra.mxu0 %v275
      %389 = vmatprep.subr.mxu0 0.0
      %390 = vmatpush1.msra.mxu0 %v276
      %391 = vmatprep.subr.mxu0 0.0
      %392 = vmatpush1.msra.mxu0 %v277
      %393 = vmatprep.subr.mxu0 0.0
      %394 = vmatpush1.msra.mxu0 %v278
      %395 = vmatprep.subr.mxu0 0.0
      %396 = vmatpush1.msra.mxu0 %v279
      %397 = vmatprep.subr.mxu0 0.0
      %398 = vmatpush1.msra.mxu0 %v280
      %399 = vmatprep.subr.mxu0 0.0
      %400 = vmatpush1.msra.mxu0 %v281
      %401 = vmatprep.subr.mxu0 0.0
      %402 = vmatpush1.msra.mxu0 %v282
      %403 = vmatprep.subr.mxu0 0.0
      %404 = vmatpush1.msra.mxu0 %v283
      %405 = vmatprep.subr.mxu0 0.0
      %406 = vmatpush1.msra.mxu0 %v284
      %407 = vmatprep.subr.mxu0 0.0
      %408 = vmatpush1.msra.mxu0 %v285
      %409 = vmatprep.subr.mxu0 0.0
      %410 = vmatpush1.msra.mxu0 %v286
      %411 = vmatprep.subr.mxu0 0.0
      %412 = vmatpush1.msra.mxu0 %v287
      %413 = vmatprep.subr.mxu0 0.0
      %414 = vmatpush1.msra.mxu0 %v288
      %415 = vmatprep.subr.mxu0 0.0
      %416 = vmatpush1.msra.mxu0 0.0
      %417 = vmatprep.subr.mxu0 0.0
      %418 = vmatpush1.msra.mxu0 0.0
      %419 = vmatprep.subr.mxu0 0.0
      %420 = vmatpush1.msra.mxu0 0.0
      %421 = vmatprep.subr.mxu0 0.0
      %422 = vmatpush1.msra.mxu0 0.0
      %423 = vmatprep.subr.mxu0 0.0
      %424 = vmatpush1.msra.mxu0 0.0
      %425 = vmatprep.subr.mxu0 0.0
      %426 = vmatpush1.msra.mxu0 0.0
      %427 = vmatprep.subr.mxu0 0.0
      %428 = vmatpush1.msra.mxu0 0.0
      %429 = vmatprep.subr.mxu0 0.0
      %430 = vmatpush1.msra.mxu0 0.0
      %431 = vmatprep.subr.mxu0 0.0
      %432 = vmatpush1.msra.mxu0 0.0
      %433 = vmatprep.subr.mxu0 0.0
      %434 = vmatpush1.msra.mxu0 0.0
      %435 = vmatprep.subr.mxu0 0.0
      %436 = vmatpush1.msra.mxu0 0.0
      %437 = vmatprep.subr.mxu0 0.0
      %438 = vmatpush1.msra.mxu0 0.0
      %439 = vmatprep.subr.mxu0 0.0
      %440 = vmatpush1.msra.mxu0 0.0
      %441 = vmatprep.subr.mxu0 0.0
      %442 = vmatpush1.msra.mxu0 0.0
      %443 = vmatprep.subr.mxu0 0.0
      %444 = vmatpush1.msra.mxu0 0.0
      %445 = vmatprep.subr.mxu0 0.0
      %446 = vmatpush1.msra.mxu0 0.0
      %447 = vmatprep.mubr.f32.mxu0 0.0
      %448 = vmatmul.mubr.f32.gmra.mrb[0].mxu0 %v271
      %v449 = vpop.f32.mrb[0].mxu0
      %v450 = vadd.f32 %v375, %v449
      %v451 = vpop.f32.mrb[0].mxu0
      %452 = vmatprep.mubr.f32.mxu0 0.0
      %453 = vmatmul.mubr.f32.gmra.mrb[0].mxu0 %v272
      %v454 = vpop.f32.mrb[0].mxu0
      %v455 = vadd.f32 %v380, %v454
      %v456 = vpop.f32.mrb[0].mxu0
      %457 = vdwg.mxu0
      %v458 = vld [vmem:[#allocation2 + $0x2] sm:$0xff]
      %v459 = vld [vmem:[#allocation2 + $0xa] sm:$0xff]
      %s460 = scalar_lea.vmem %s1, 256
      %v461 = vld [vmem:[%s460] sm:$0xff]
      %v462 = vld [vmem:[%s460 + $0x8] sm:$0xff]
      %v463 = vld [vmem:[%s460 + $0x10] sm:$0xff]
      %v464 = vld [vmem:[%s460 + $0x18] sm:$0xff]
      %v465 = vld [vmem:[%s460 + $0x20] sm:$0xff]
      %v466 = vld [vmem:[%s460 + $0x28] sm:$0xff]
      %v467 = vld [vmem:[%s460 + $0x30] sm:$0xff]
      %v468 = vld [vmem:[%s460 + $0x38] sm:$0xff]
      %v469 = vld [vmem:[%s460 + $0x40] sm:$0xff]
      %v470 = vld [vmem:[%s460 + $0x48] sm:$0xff]
      %v471 = vld [vmem:[%s460 + $0x50] sm:$0xff]
      %v472 = vld [vmem:[%s460 + $0x58] sm:$0xff]
      %v473 = vld [vmem:[%s460 + $0x60] sm:$0xff]
      %v474 = vld [vmem:[%s460 + $0x68] sm:$0xff]
      %v475 = vld [vmem:[%s460 + $0x70] sm:$0xff]
      %v476 = vld [vmem:[%s460 + $0x78] sm:$0xff]
      %477 = vmatprep.subr.mxu0 0.0
      %478 = vmatpush1.msra.mxu0 %v461
      %479 = vmatprep.subr.mxu0 0.0
      %480 = vmatpush1.msra.mxu0 %v462
      %481 = vmatprep.subr.mxu0 0.0
      %482 = vmatpush1.msra.mxu0 %v463
      %483 = vmatprep.subr.mxu0 0.0
      %484 = vmatpush1.msra.mxu0 %v464
      %485 = vmatprep.subr.mxu0 0.0
      %486 = vmatpush1.msra.mxu0 %v465
      %487 = vmatprep.subr.mxu0 0.0
      %488 = vmatpush1.msra.mxu0 %v466
      %489 = vmatprep.subr.mxu0 0.0
      %490 = vmatpush1.msra.mxu0 %v467
      %491 = vmatprep.subr.mxu0 0.0
      %492 = vmatpush1.msra.mxu0 %v468
      %493 = vmatprep.subr.mxu0 0.0
      %494 = vmatpush1.msra.mxu0 %v469
      %495 = vmatprep.subr.mxu0 0.0
      %496 = vmatpush1.msra.mxu0 %v470
      %497 = vmatprep.subr.mxu0 0.0
      %498 = vmatpush1.msra.mxu0 %v471
      %499 = vmatprep.subr.mxu0 0.0
      %500 = vmatpush1.msra.mxu0 %v472
      %501 = vmatprep.subr.mxu0 0.0
      %502 = vmatpush1.msra.mxu0 %v473
      %503 = vmatprep.subr.mxu0 0.0
      %504 = vmatpush1.msra.mxu0 %v474
      %505 = vmatprep.subr.mxu0 0.0
      %506 = vmatpush1.msra.mxu0 %v475
      %507 = vmatprep.subr.mxu0 0.0
      %508 = vmatpush1.msra.mxu0 %v476
      %509 = vmatprep.subr.mxu0 0.0
      %510 = vmatpush1.msra.mxu0 0.0
      %511 = vmatprep.subr.mxu0 0.0
      %512 = vmatpush1.msra.mxu0 0.0
      %513 = vmatprep.subr.mxu0 0.0
      %514 = vmatpush1.msra.mxu0 0.0
      %515 = vmatprep.subr.mxu0 0.0
      %516 = vmatpush1.msra.mxu0 0.0
      %517 = vmatprep.subr.mxu0 0.0
      %518 = vmatpush1.msra.mxu0 0.0
      %519 = vmatprep.subr.mxu0 0.0
      %520 = vmatpush1.msra.mxu0 0.0
      %521 = vmatprep.subr.mxu0 0.0
      %522 = vmatpush1.msra.mxu0 0.0
      %523 = vmatprep.subr.mxu0 0.0
      %524 = vmatpush1.msra.mxu0 0.0
      %525 = vmatprep.subr.mxu0 0.0
      %526 = vmatpush1.msra.mxu0 0.0
      %527 = vmatprep.subr.mxu0 0.0
      %528 = vmatpush1.msra.mxu0 0.0
      %529 = vmatprep.subr.mxu0 0.0
      %530 = vmatpush1.msra.mxu0 0.0
      %531 = vmatprep.subr.mxu0 0.0
      %532 = vmatpush1.msra.mxu0 0.0
      %533 = vmatprep.subr.mxu0 0.0
      %534 = vmatpush1.msra.mxu0 0.0
      %535 = vmatprep.subr.mxu0 0.0
      %536 = vmatpush1.msra.mxu0 0.0
      %537 = vmatprep.subr.mxu0 0.0
      %538 = vmatpush1.msra.mxu0 0.0
      %539 = vmatprep.subr.mxu0 0.0
      %540 = vmatpush1.msra.mxu0 0.0
      %541 = vmatprep.mubr.f32.mxu0 0.0
      %542 = vmatmul.mubr.f32.gmra.mrb[0].mxu0 %v458
      %v543 = vpop.f32.mrb[0].mxu0
      %v544 = vadd.f32 0.0, %v543
      %v545 = vpop.f32.mrb[0].mxu0
      %546 = vmatprep.mubr.f32.mxu0 0.0
      %547 = vmatmul.mubr.f32.gmra.mrb[0].mxu0 %v459
      %v548 = vpop.f32.mrb[0].mxu0
      %v549 = vadd.f32 0.0, %v548
      %v550 = vpop.f32.mrb[0].mxu0
      %551 = vdwg.mxu0
      %v552 = vadd.f32 %v450, %v544
      %v553 = vadd.f32 %v455, %v549
      %v554 = vld [vmem:[%s2] sm:$0x1]
      %v556 = vlaneseq
      %v557 = vshrl.u32 %v556, 7
      %v558 = vsub.s32 0, %v557
      %v559 = vrot.slane %v554, %v558
      %v561 = vadd.f32 %v552, %v559
      %v562 = vadd.f32 %v553, %v559
      %v563 = vmax.f32 %v561, 0.0
      %v564 = vmax.f32 %v562, 0.0
      %565 = vst [vmem:[#allocation3] sm:$0x1] 0.0
      %566 = vst [vmem:[#allocation3 + $0x11] sm:$0x1] 0.0
      %567 = vst [vmem:[#allocation3 + $0x1] sm:$0xff] %v563
      %568 = vst [vmem:[#allocation3 + $0x9] sm:$0xff] %v564
      %v569 = vld [vmem:[#allocation3] sm:$0xff]
      %v570 = vld [vmem:[#allocation3 + $0x8] sm:$0xff]
      %v571 = vld [vmem:[%s3] sm:$0xff]
      %v572 = vld [vmem:[%s3 + $0x8] sm:$0xff]
      %v573 = vld [vmem:[%s3 + $0x10] sm:$0xff]
      %v574 = vld [vmem:[%s3 + $0x18] sm:$0xff]
      %v575 = vld [vmem:[%s3 + $0x20] sm:$0xff]
      %v576 = vld [vmem:[%s3 + $0x28] sm:$0xff]
      %v577 = vld [vmem:[%s3 + $0x30] sm:$0xff]
      %v578 = vld [vmem:[%s3 + $0x38] sm:$0xff]
      %v579 = vld [vmem:[%s3 + $0x40] sm:$0xff]
      %v580 = vld [vmem:[%s3 + $0x48] sm:$0xff]
      %v581 = vld [vmem:[%s3 + $0x50] sm:$0xff]
      %v582 = vld [vmem:[%s3 + $0x58] sm:$0xff]
      %v583 = vld [vmem:[%s3 + $0x60] sm:$0xff]
      %v584 = vld [vmem:[%s3 + $0x68] sm:$0xff]
      %v585 = vld [vmem:[%s3 + $0x70] sm:$0xff]
      %v586 = vld [vmem:[%s3 + $0x78] sm:$0xff]
      %v587 = vld [vmem:[#allocation3 + $0x1] sm:$0xff]
      %v588 = vld [vmem:[#allocation3 + $0x9] sm:$0xff]
      %s589 = scalar_lea.vmem %s3, 128
      %v590 = vld [vmem:[%s589] sm:$0xff]
      %v591 = vld [vmem:[%s589 + $0x8] sm:$0xff]
      %v592 = vld [vmem:[%s589 + $0x10] sm:$0xff]
      %v593 = vld [vmem:[%s589 + $0x18] sm:$0xff]
      %v594 = vld [vmem:[%s589 + $0x20] sm:$0xff]
      %v595 = vld [vmem:[%s589 + $0x28] sm:$0xff]
      %v596 = vld [vmem:[%s589 + $0x30] sm:$0xff]
      %v597 = vld [vmem:[%s589 + $0x38] sm:$0xff]
      %v598 = vld [vmem:[%s589 + $0x40] sm:$0xff]
      %v599 = vld [vmem:[%s589 + $0x48] sm:$0xff]
      %v600 = vld [vmem:[%s589 + $0x50] sm:$0xff]
      %v601 = vld [vmem:[%s589 + $0x58] sm:$0xff]
      %v602 = vld [vmem:[%s589 + $0x60] sm:$0xff]
      %v603 = vld [vmem:[%s589 + $0x68] sm:$0xff]
      %v604 = vld [vmem:[%s589 + $0x70] sm:$0xff]
      %v605 = vld [vmem:[%s589 + $0x78] sm:$0xff]
      %606 = vmatprep.subr.mxu0 0.0
      %607 = vmatpush1.msra.mxu0 %v590
      %608 = vmatprep.subr.mxu0 0.0
      %609 = vmatpush1.msra.mxu0 %v591
      %610 = vmatprep.subr.mxu0 0.0
      %611 = vmatpush1.msra.mxu0 %v592
      %612 = vmatprep.subr.mxu0 0.0
      %613 = vmatpush1.msra.mxu0 %v593
      %614 = vmatprep.subr.mxu0 0.0
      %615 = vmatpush1.msra.mxu0 %v594
      %616 = vmatprep.subr.mxu0 0.0
      %617 = vmatpush1.msra.mxu0 %v595
      %618 = vmatprep.subr.mxu0 0.0
      %619 = vmatpush1.msra.mxu0 %v596
      %620 = vmatprep.subr.mxu0 0.0
      %621 = vmatpush1.msra.mxu0 %v597
      %622 = vmatprep.subr.mxu0 0.0
      %623 = vmatpush1.msra.mxu0 %v598
      %624 = vmatprep.subr.mxu0 0.0
      %625 = vmatpush1.msra.mxu0 %v599
      %626 = vmatprep.subr.mxu0 0.0
      %627 = vmatpush1.msra.mxu0 %v600
      %628 = vmatprep.subr.mxu0 0.0
      %629 = vmatpush1.msra.mxu0 %v601
      %630 = vmatprep.subr.mxu0 0.0
      %631 = vmatpush1.msra.mxu0 %v602
      %632 = vmatprep.subr.mxu0 0.0
      %633 = vmatpush1.msra.mxu0 %v603
      %634 = vmatprep.subr.mxu0 0.0
      %635 = vmatpush1.msra.mxu0 %v604
      %636 = vmatprep.subr.mxu0 0.0
      %637 = vmatpush1.msra.mxu0 %v605
      %638 = vmatprep.subr.mxu0 0.0
      %639 = vmatpush1.msra.mxu0 0.0
      %640 = vmatprep.subr.mxu0 0.0
      %641 = vmatpush1.msra.mxu0 0.0
      %642 = vmatprep.subr.mxu0 0.0
      %643 = vmatpush1.msra.mxu0 0.0
      %644 = vmatprep.subr.mxu0 0.0
      %645 = vmatpush1.msra.mxu0 0.0
      %646 = vmatprep.subr.mxu0 0.0
      %647 = vmatpush1.msra.mxu0 0.0
      %648 = vmatprep.subr.mxu0 0.0
      %649 = vmatpush1.msra.mxu0 0.0
      %650 = vmatprep.subr.mxu0 0.0
      %651 = vmatpush1.msra.mxu0 0.0
      %652 = vmatprep.subr.mxu0 0.0
      %653 = vmatpush1.msra.mxu0 0.0
      %654 = vmatprep.subr.mxu0 0.0
      %655 = vmatpush1.msra.mxu0 0.0
      %656 = vmatprep.subr.mxu0 0.0
      %657 = vmatpush1.msra.mxu0 0.0
      %658 = vmatprep.subr.mxu0 0.0
      %659 = vmatpush1.msra.mxu0 0.0
      %660 = vmatprep.subr.mxu0 0.0
      %661 = vmatpush1.msra.mxu0 0.0
      %662 = vmatprep.subr.mxu0 0.0
      %663 = vmatpush1.msra.mxu0 0.0
      %664 = vmatprep.subr.mxu0 0.0
      %665 = vmatpush1.msra.mxu0 0.0
      %666 = vmatprep.subr.mxu0 0.0
      %667 = vmatpush1.msra.mxu0 0.0
      %668 = vmatprep.subr.mxu0 0.0
      %669 = vmatpush1.msra.mxu0 0.0
      %670 = vmatprep.mubr.f32.mxu0 0.0
      %671 = vmatmul.mubr.f32.gmra.mrb[0].mxu0 %v587
      %v672 = vpop.f32.mrb[0].mxu0
      %v673 = vadd.f32 0.0, %v672
      %v674 = vpop.f32.mrb[0].mxu0
      %675 = vmatprep.mubr.f32.mxu0 0.0
      %676 = vmatmul.mubr.f32.gmra.mrb[0].mxu0 %v588
      %v677 = vpop.f32.mrb[0].mxu0
      %v678 = vadd.f32 0.0, %v677
      %v679 = vpop.f32.mrb[0].mxu0
      %680 = vdwg.mxu0
      %681 = vmatprep.subr.mxu0 0.0
      %682 = vmatpush1.msra.mxu0 %v571
      %683 = vmatprep.subr.mxu0 0.0
      %684 = vmatpush1.msra.mxu0 %v572
      %685 = vmatprep.subr.mxu0 0.0
      %686 = vmatpush1.msra.mxu0 %v573
      %687 = vmatprep.subr.mxu0 0.0
      %688 = vmatpush1.msra.mxu0 %v574
      %689 = vmatprep.subr.mxu0 0.0
      %690 = vmatpush1.msra.mxu0 %v575
      %691 = vmatprep.subr.mxu0 0.0
      %692 = vmatpush1.msra.mxu0 %v576
      %693 = vmatprep.subr.mxu0 0.0
      %694 = vmatpush1.msra.mxu0 %v577
      %695 = vmatprep.subr.mxu0 0.0
      %696 = vmatpush1.msra.mxu0 %v578
      %697 = vmatprep.subr.mxu0 0.0
      %698 = vmatpush1.msra.mxu0 %v579
      %699 = vmatprep.subr.mxu0 0.0
      %700 = vmatpush1.msra.mxu0 %v580
      %701 = vmatprep.subr.mxu0 0.0
      %702 = vmatpush1.msra.mxu0 %v581
      %703 = vmatprep.subr.mxu0 0.0
      %704 = vmatpush1.msra.mxu0 %v582
      %705 = vmatprep.subr.mxu0 0.0
      %706 = vmatpush1.msra.mxu0 %v583
      %707 = vmatprep.subr.mxu0 0.0
      %708 = vmatpush1.msra.mxu0 %v584
      %709 = vmatprep.subr.mxu0 0.0
      %710 = vmatpush1.msra.mxu0 %v585
      %711 = vmatprep.subr.mxu0 0.0
      %712 = vmatpush1.msra.mxu0 %v586
      %713 = vmatprep.subr.mxu0 0.0
      %714 = vmatpush1.msra.mxu0 0.0
      %715 = vmatprep.subr.mxu0 0.0
      %716 = vmatpush1.msra.mxu0 0.0
      %717 = vmatprep.subr.mxu0 0.0
      %718 = vmatpush1.msra.mxu0 0.0
      %719 = vmatprep.subr.mxu0 0.0
      %720 = vmatpush1.msra.mxu0 0.0
      %721 = vmatprep.subr.mxu0 0.0
      %722 = vmatpush1.msra.mxu0 0.0
      %723 = vmatprep.subr.mxu0 0.0
      %724 = vmatpush1.msra.mxu0 0.0
      %725 = vmatprep.subr.mxu0 0.0
      %726 = vmatpush1.msra.mxu0 0.0
      %727 = vmatprep.subr.mxu0 0.0
      %728 = vmatpush1.msra.mxu0 0.0
      %729 = vmatprep.subr.mxu0 0.0
      %730 = vmatpush1.msra.mxu0 0.0
      %731 = vmatprep.subr.mxu0 0.0
      %732 = vmatpush1.msra.mxu0 0.0
      %733 = vmatprep.subr.mxu0 0.0
      %734 = vmatpush1.msra.mxu0 0.0
      %735 = vmatprep.subr.mxu0 0.0
      %736 = vmatpush1.msra.mxu0 0.0
      %737 = vmatprep.subr.mxu0 0.0
      %738 = vmatpush1.msra.mxu0 0.0
      %739 = vmatprep.subr.mxu0 0.0
      %740 = vmatpush1.msra.mxu0 0.0
      %741 = vmatprep.subr.mxu0 0.0
      %742 = vmatpush1.msra.mxu0 0.0
      %743 = vmatprep.subr.mxu0 0.0
      %744 = vmatpush1.msra.mxu0 0.0
      %745 = vmatprep.mubr.f32.mxu0 0.0
      %746 = vmatmul.mubr.f32.gmra.mrb[0].mxu0 %v569
      %v747 = vpop.f32.mrb[0].mxu0
      %v748 = vadd.f32 %v673, %v747
      %v749 = vpop.f32.mrb[0].mxu0
      %750 = vmatprep.mubr.f32.mxu0 0.0
      %751 = vmatmul.mubr.f32.gmra.mrb[0].mxu0 %v570
      %v752 = vpop.f32.mrb[0].mxu0
      %v753 = vadd.f32 %v678, %v752
      %v754 = vpop.f32.mrb[0].mxu0
      %755 = vdwg.mxu0
      %v756 = vld [vmem:[#allocation3 + $0x2] sm:$0xff]
      %v757 = vld [vmem:[#allocation3 + $0xa] sm:$0xff]
      %s758 = scalar_lea.vmem %s3, 256
      %v759 = vld [vmem:[%s758] sm:$0xff]
      %v760 = vld [vmem:[%s758 + $0x8] sm:$0xff]
      %v761 = vld [vmem:[%s758 + $0x10] sm:$0xff]
      %v762 = vld [vmem:[%s758 + $0x18] sm:$0xff]
      %v763 = vld [vmem:[%s758 + $0x20] sm:$0xff]
      %v764 = vld [vmem:[%s758 + $0x28] sm:$0xff]
      %v765 = vld [vmem:[%s758 + $0x30] sm:$0xff]
      %v766 = vld [vmem:[%s758 + $0x38] sm:$0xff]
      %v767 = vld [vmem:[%s758 + $0x40] sm:$0xff]
      %v768 = vld [vmem:[%s758 + $0x48] sm:$0xff]
      %v769 = vld [vmem:[%s758 + $0x50] sm:$0xff]
      %v770 = vld [vmem:[%s758 + $0x58] sm:$0xff]
      %v771 = vld [vmem:[%s758 + $0x60] sm:$0xff]
      %v772 = vld [vmem:[%s758 + $0x68] sm:$0xff]
      %v773 = vld [vmem:[%s758 + $0x70] sm:$0xff]
      %v774 = vld [vmem:[%s758 + $0x78] sm:$0xff]
      %775 = vmatprep.subr.mxu0 0.0
      %776 = vmatpush1.msra.mxu0 %v759
      %777 = vmatprep.subr.mxu0 0.0
      %778 = vmatpush1.msra.mxu0 %v760
      %779 = vmatprep.subr.mxu0 0.0
      %780 = vmatpush1.msra.mxu0 %v761
      %781 = vmatprep.subr.mxu0 0.0
      %782 = vmatpush1.msra.mxu0 %v762
      %783 = vmatprep.subr.mxu0 0.0
      %784 = vmatpush1.msra.mxu0 %v763
      %785 = vmatprep.subr.mxu0 0.0
      %786 = vmatpush1.msra.mxu0 %v764
      %787 = vmatprep.subr.mxu0 0.0
      %788 = vmatpush1.msra.mxu0 %v765
      %789 = vmatprep.subr.mxu0 0.0
      %790 = vmatpush1.msra.mxu0 %v766
      %791 = vmatprep.subr.mxu0 0.0
      %792 = vmatpush1.msra.mxu0 %v767
      %793 = vmatprep.subr.mxu0 0.0
      %794 = vmatpush1.msra.mxu0 %v768
      %795 = vmatprep.subr.mxu0 0.0
      %796 = vmatpush1.msra.mxu0 %v769
      %797 = vmatprep.subr.mxu0 0.0
      %798 = vmatpush1.msra.mxu0 %v770
      %799 = vmatprep.subr.mxu0 0.0
      %800 = vmatpush1.msra.mxu0 %v771
      %801 = vmatprep.subr.mxu0 0.0
      %802 = vmatpush1.msra.mxu0 %v772
      %803 = vmatprep.subr.mxu0 0.0
      %804 = vmatpush1.msra.mxu0 %v773
      %805 = vmatprep.subr.mxu0 0.0
      %806 = vmatpush1.msra.mxu0 %v774
      %807 = vmatprep.subr.mxu0 0.0
      %808 = vmatpush1.msra.mxu0 0.0
      %809 = vmatprep.subr.mxu0 0.0
      %810 = vmatpush1.msra.mxu0 0.0
      %811 = vmatprep.subr.mxu0 0.0
      %812 = vmatpush1.msra.mxu0 0.0
      %813 = vmatprep.subr.mxu0 0.0
      %814 = vmatpush1.msra.mxu0 0.0
      %815 = vmatprep.subr.mxu0 0.0
      %816 = vmatpush1.msra.mxu0 0.0
      %817 = vmatprep.subr.mxu0 0.0
      %818 = vmatpush1.msra.mxu0 0.0
      %819 = vmatprep.subr.mxu0 0.0
      %820 = vmatpush1.msra.mxu0 0.0
      %821 = vmatprep.subr.mxu0 0.0
      %822 = vmatpush1.msra.mxu0 0.0
      %823 = vmatprep.subr.mxu0 0.0
      %824 = vmatpush1.msra.mxu0 0.0
      %825 = vmatprep.subr.mxu0 0.0
      %826 = vmatpush1.msra.mxu0 0.0
      %827 = vmatprep.subr.mxu0 0.0
      %828 = vmatpush1.msra.mxu0 0.0
      %829 = vmatprep.subr.mxu0 0.0
      %830 = vmatpush1.msra.mxu0 0.0
      %831 = vmatprep.subr.mxu0 0.0
      %832 = vmatpush1.msra.mxu0 0.0
      %833 = vmatprep.subr.mxu0 0.0
      %834 = vmatpush1.msra.mxu0 0.0
      %835 = vmatprep.subr.mxu0 0.0
      %836 = vmatpush1.msra.mxu0 0.0
      %837 = vmatprep.subr.mxu0 0.0
      %838 = vmatpush1.msra.mxu0 0.0
      %839 = vmatprep.mubr.f32.mxu0 0.0
      %840 = vmatmul.mubr.f32.gmra.mrb[0].mxu0 %v756
      %v841 = vpop.f32.mrb[0].mxu0
      %v842 = vadd.f32 0.0, %v841
      %v843 = vpop.f32.mrb[0].mxu0
      %844 = vmatprep.mubr.f32.mxu0 0.0
      %845 = vmatmul.mubr.f32.gmra.mrb[0].mxu0 %v757
      %v846 = vpop.f32.mrb[0].mxu0
      %v847 = vadd.f32 0.0, %v846
      %v848 = vpop.f32.mrb[0].mxu0
      %849 = vdwg.mxu0
      %v850 = vadd.f32 %v748, %v842
      %v851 = vadd.f32 %v753, %v847
      %v852 = vld [vmem:[%s4] sm:$0x1]
      %v854 = vlaneseq
      %v855 = vshrl.u32 %v854, 7
      %v856 = vsub.s32 0, %v855
      %v857 = vrot.slane %v852, %v856
      %v859 = vadd.f32 %v850, %v857
      %v860 = vadd.f32 %v851, %v857
      %v861 = vld [vmem:[%s254] sm:$0xff]
      %v862 = vld [vmem:[%s254 + $0x8] sm:$0xff]
      %v863 = vadd.f32 %v859, %v861
      %v864 = vadd.f32 %v860, %v862
      %865 = vst [vmem:[%s259] sm:$0xff] %v863
      %866 = vst [vmem:[%s259 + $0x8] sm:$0xff] %v864
      %v867 = vmax.f32 %v863, 0.0
      %v868 = vmax.f32 %v864, 0.0
      %869 = vst [vmem:[%s264] sm:$0xff] %v867
      %870 = vst [vmem:[%s264 + $0x8] sm:$0xff] %v868
      %p871 = scmp.lt.s32.totalorder %s18, 1
      %s872 = scalar_select %p871, %s18, 1
      %s873 = smul.addr %s872, 2
      %s874 = smul.addr %s873, 8
      %s875 = scalar_lea.vmem %s5, %s874
      %p876 = scmp.lt.s32.totalorder %s18, 1
      %s877 = scalar_select %p876, %s18, 1
      %s878 = smul.addr %s877, 2
      %s879 = smul.addr %s878, 8
      %s880 = scalar_lea.vmem %s6, %s879
      // Predicated region
      $region41: #{basic_block_forward.1} parent=39 // pred_check
        %p881 = pneg %p146
      $region42: #{basic_block_forward.1} parent=39 // pred_check_branch
        %883 = sbr.rel (%p881) target = $region44
      $region43: #{basic_block_forward.1} parent=39 // pred_region
        _
      $region44: #{basic_block_forward.1} parent=39 // pred_fallthru
        _
      // Predicated region
      $region45: #{basic_block_forward.1} parent=39 // pred_check
        %p884 = pneg %p172
      $region46: #{basic_block_forward.1} parent=39 // pred_check_branch
        %886 = sbr.rel (%p884) target = $region48
      $region47: #{basic_block_forward.1} parent=39 // pred_region
        _
      $region48: #{basic_block_forward.1} parent=39 // pred_fallthru
        _
    $region40: #{basic_block_forward.1} parent=5 // pred_fallthru
      _
    %p887 = scmp.le.s32.totalorder 2, %s13
    // Predicated region
    $region49: #{basic_block_forward.1} parent=5 // pred_check
      %p888 = pneg %p887
    $region50: #{basic_block_forward.1} parent=5 // pred_check_branch
      %890 = sbr.rel (%p888) target = $region52
    $region51: #{basic_block_forward.1} parent=5 // pred_region
      %s891 = ssub.s32 %s13, 2
      // Predicated region
      $region53: #{basic_block_forward.1} parent=51 // pred_check
        %p892 = pneg %p152
      $region54: #{basic_block_forward.1} parent=51 // pred_check_branch
        %894 = sbr.rel (%p892) target = $region56
      $region55: #{basic_block_forward.1} parent=51 // pred_region
        %p895 = scmp.lt.s32.totalorder %s19, 1
        %s896 = scalar_select %p895, %s19, 1
        %s897 = smul.addr %s896, 2
        %s898 = smul.addr %s897, 8
        %s899 = scalar_lea.vmem %s5, %s898
      $region56: #{basic_block_forward.1} parent=51 // pred_fallthru
        _
      // Predicated region
      $region57: #{basic_block_forward.1} parent=51 // pred_check
        %p900 = pneg %p178
      $region58: #{basic_block_forward.1} parent=51 // pred_check_branch
        %902 = sbr.rel (%p900) target = $region60
      $region59: #{basic_block_forward.1} parent=51 // pred_region
        %p903 = scmp.lt.s32.totalorder %s19, 1
        %s904 = scalar_select %p903, %s19, 1
        %s905 = smul.addr %s904, 2
        %s906 = smul.addr %s905, 8
        %s907 = scalar_lea.vmem %s6, %s906
      $region60: #{basic_block_forward.1} parent=51 // pred_fallthru
        _
    $region52: #{basic_block_forward.1} parent=5 // pred_fallthru
      _
  $region6: #{basic_block_forward.1} parent=0 // loop_footer
    %s17 = sadd.s32 1, %s13
  $region7: #{basic_block_forward.1} parent=0 // loop_footer_branch
    %12 = sbr.rel target = $region3
  $region8: #{basic_block_forward.1} parent=0 // loop_exit
    _

</llo_original>
